<compile_context>
chip_gen: v6e
topology: v6e:2x2x1
jax: 0.10.0
libtpu: 0.0.40
codegen_flags: <defaults>
</compile_context>

<pallas_src>
import jax
import jax.numpy as jnp
from jax.experimental import pallas as pl
from jax.experimental.pallas import tpu as pltpu

_LANE = 128
_SUBLANE = 8


def _round_up(x, m):
    return ((x + m - 1) // m) * m


# --------------------------------------------------------------------------
# Kernel
# --------------------------------------------------------------------------
def dueling_dqn_kernel(state_ref, w1_ref, b1_ref, wq_ref, bq_ref, q_ref):
    # Hidden layer: x = relu(state @ W1 + b1), f32 accumulation / elementwise.
    x = jnp.dot(state_ref[...].astype(w1_ref.dtype), w1_ref[...],
                preferred_element_type=jnp.float32)
    x = jnp.maximum(x + b1_ref[...], 0.0)

    # Collapsed dueling head (single matmul, exactly action_dim columns).
    q = jnp.dot(x.astype(wq_ref.dtype), wq_ref[...],
                preferred_element_type=jnp.float32) + bq_ref[...]
    q_ref[...] = q.astype(q_ref.dtype)


# --------------------------------------------------------------------------
# One-time parameter preparation (hoisted out of the hot path)
# --------------------------------------------------------------------------
def prepare_params(w1, b1, wa, ba, wv, bv, *, matmul_dtype=jnp.float32):
    """Pad/pack weights once.  Weights are (in, out) for y = x @ W + b."""
    state_dim, hidden_dim = w1.shape
    action_dim = wa.shape[1]
    hpad = _round_up(hidden_dim, _LANE)

    # fc1, zero-padded to 128 hidden lanes (padded lanes stay exactly 0
    # through bias + ReLU, so they never contribute to the head matmul).
    w1p = jnp.zeros((state_dim, hpad), matmul_dtype)
    w1p = w1p.at[:, :hidden_dim].set(w1.astype(matmul_dtype))
    b1p = jnp.zeros((1, hpad), jnp.float32).at[:, :hidden_dim].set(b1)

    # Collapse the dueling combine into a single linear layer:
    #   Q = val + adv - mean(adv) = x @ Wq + bq
    wq = wv + wa - jnp.mean(wa, axis=1, keepdims=True)          # (hidden, A)
    bq = (bv + ba - jnp.mean(ba, axis=1, keepdims=True))        # (1, A)

    wqp = jnp.zeros((hpad, action_dim), matmul_dtype)
    wqp = wqp.at[:hidden_dim, :].set(wq.astype(matmul_dtype))
    bqp = bq.astype(jnp.float32)

    return w1p, b1p, wqp, bqp, action_dim


# --------------------------------------------------------------------------
# Forward
# --------------------------------------------------------------------------
def dueling_dqn_forward(state, prepped, *, block_batch=512):
    w1p, b1p, wqp, bqp, action_dim = prepped
    batch, state_dim = state.shape
    hpad = w1p.shape[1]

    # Batch tiling: tile is a multiple of 8 sublanes, <= block_batch, and
    # capped at ~half the batch so the grid keeps >= 2 steps when possible
    # (lets both v7x TensorCores work; harmless on v5e/v6e).
    block_batch = max(_SUBLANE, _round_up(block_batch, _SUBLANE))
    padded = _round_up(batch, _SUBLANE)
    half = _round_up(-(-padded // 2), _SUBLANE) if padded > _SUBLANE else padded
    tb = max(_SUBLANE, min(block_batch, half))
    padded_batch = _round_up(padded, tb)

    if padded_batch != batch:
        state_p = jnp.zeros((padded_batch, state_dim),
                            state.dtype).at[:batch].set(state)
    else:
        state_p = state

    grid = padded_batch // tb

    q = pl.pallas_call(
        dueling_dqn_kernel,
        out_shape=jax.ShapeDtypeStruct((padded_batch, action_dim), jnp.float32),
        grid_spec=pltpu.PrefetchScalarGridSpec(
            num_scalar_prefetch=0,
            grid=(grid,),
            in_specs=[
                pl.BlockSpec((tb, state_dim), lambda i: (i, 0)),       # state tile
                pl.BlockSpec((state_dim, hpad), lambda i: (0, 0)),     # W1 (resident)
                pl.BlockSpec((1, hpad), lambda i: (0, 0)),             # b1 (resident)
                pl.BlockSpec((hpad, action_dim), lambda i: (0, 0)),    # Wq (resident)
                pl.BlockSpec((1, action_dim), lambda i: (0, 0)),       # bq (resident)
            ],
            out_specs=pl.BlockSpec((tb, action_dim), lambda i: (i, 0)),
        ),
        compiler_params=pltpu.CompilerParams(
            dimension_semantics=("parallel",)),
    )(state_p, w1p, b1p, wqp, bqp)

    return q if padded_batch == batch else q[:batch]


# --------------------------------------------------------------------------
# Test harness
# --------------------------------------------------------------------------
def init_params(key, state_dim, hidden_dim, action_dim):
    """Deterministic synthetic params matching nn.Linear shapes
    (stored transposed as (in, out) for y = x @ W + b)."""
    k1, k2, k3, k4, k5, k6 = jax.random.split(key, 6)
    scale1 = 1.0 / jnp.sqrt(state_dim)
    scaleh = 1.0 / jnp.sqrt(hidden_dim)
    w1 = jax.random.uniform(k1, (state_dim, hidden_dim), jnp.float32,
                            -scale1, scale1)
    b1 = jax.random.uniform(k2, (1, hidden_dim), jnp.float32, -scale1, scale1)
    wa = jax.random.uniform(k3, (hidden_dim, action_dim), jnp.float32,
                            -scaleh, scaleh)
    ba = jax.random.uniform(k4, (1, action_dim), jnp.float32, -scaleh, scaleh)
    wv = jax.random.uniform(k5, (hidden_dim, 1), jnp.float32, -scaleh, scaleh)
    bv = jax.random.uniform(k6, (1, 1), jnp.float32, -scaleh, scaleh)
    return w1, b1, wa, ba, wv, bv


def reference_forward(state, w1, b1, wa, ba, wv, bv):
    x = jax.nn.relu(state @ w1 + b1)
    adv = x @ wa + ba
    val = x @ wv + bv
    return val + adv - jnp.mean(adv, axis=1, keepdims=True)


if __name__ == "__main__":
    state_dim, action_dim, hidden_dim = 16, 8, 32
    batch = 2

    key = jax.random.PRNGKey(0)
    k_state, k_params = jax.random.split(key)

    state = jax.random.normal(k_state, (batch, state_dim), jnp.float32)
    params = init_params(k_params, state_dim, hidden_dim, action_dim)
    q_ref = reference_forward(state, *params)

    # f32 matmul path (exact match with the reference).
    prepped_f32 = prepare_params(*params, matmul_dtype=jnp.float32)
    q = jax.block_until_ready(dueling_dqn_forward(state, prepped_f32))
    assert q.shape == (batch, action_dim)
    assert jnp.allclose(q, q_ref, atol=1e-5, rtol=1e-5), "f32 mismatch vs reference"

    # bf16 matmul path (MXU-native on v6e/v7x); f32 accumulation + epilogue.
    prepped_bf16 = prepare_params(*params, matmul_dtype=jnp.bfloat16)
    q_bf16 = jax.block_until_ready(dueling_dqn_forward(state, prepped_bf16))
    assert q_bf16.shape == (batch, action_dim)
    assert jnp.allclose(q_bf16, q_ref, atol=5e-2, rtol=5e-2), "bf16 mismatch vs reference"

    print("KERNEL_OK")
</pallas_src>

<mosaic_0001>
module attributes {stable_mosaic.version = 11 : i64} {
  func.func @dueling_dqn_kernel(%arg0: i32, %arg1: memref<8x16xf32, #tpu.memory_space<vmem>>, %arg2: memref<16x128xf32, #tpu.memory_space<vmem>>, %arg3: memref<1x128xf32, #tpu.memory_space<vmem>>, %arg4: memref<128x8xf32, #tpu.memory_space<vmem>>, %arg5: memref<1x8xf32, #tpu.memory_space<vmem>>, %arg6: memref<8x8xf32, #tpu.memory_space<vmem>>) attributes {dimension_semantics = [#tpu.dimension_semantics<parallel>], iteration_bounds = array<i64: 1>, scalar_prefetch = 0 : i64, scratch_operands = 0 : i64, tpu.core_type = #tpu.core_type<tc>, window_params = [{transform_indices = @transform_0, window_bounds = array<i64: 8, 16>}, {pipeline_mode = #tpu.pipeline_mode<synchronous>, transform_indices = @transform_1, window_bounds = array<i64: 16, 128>}, {pipeline_mode = #tpu.pipeline_mode<synchronous>, transform_indices = @transform_2, window_bounds = array<i64: 1, 128>}, {pipeline_mode = #tpu.pipeline_mode<synchronous>, transform_indices = @transform_3, window_bounds = array<i64: 128, 8>}, {pipeline_mode = #tpu.pipeline_mode<synchronous>, transform_indices = @transform_4, window_bounds = array<i64: 1, 8>}, {transform_indices = @transform_5, window_bounds = array<i64: 8, 8>}]} {
    %c0 = arith.constant 0 : index
    %c0_0 = arith.constant 0 : index
    %0 = vector.load %arg1[%c0, %c0_0] : memref<8x16xf32, #tpu.memory_space<vmem>>, vector<8x16xf32>
    %c0_1 = arith.constant 0 : index
    %c0_2 = arith.constant 0 : index
    %1 = vector.load %arg2[%c0_1, %c0_2] : memref<16x128xf32, #tpu.memory_space<vmem>>, vector<16x128xf32>
    %cst = arith.constant dense<0.000000e+00> : vector<8x128xf32>
    %2 = tpu.matmul %0, %1, %cst {dimension_numbers = #tpu.dot_dimension_numbers<[1], [0], [0], [1], [0, 0, 1, 1], [], []>} : vector<8x16xf32>, vector<16x128xf32>, vector<8x128xf32> -> vector<8x128xf32>
    %c0_3 = arith.constant 0 : index
    %c0_4 = arith.constant 0 : index
    %3 = vector.load %arg3[%c0_3, %c0_4] : memref<1x128xf32, #tpu.memory_space<vmem>>, vector<1x128xf32>
    %4 = vector.broadcast %3 : vector<1x128xf32> to vector<8x128xf32>
    %5 = arith.addf %2, %4 : vector<8x128xf32>
    %cst_5 = arith.constant 0.000000e+00 : f32
    %6 = vector.broadcast %cst_5 : f32 to vector<8x128xf32>
    %7 = arith.maximumf %5, %6 : vector<8x128xf32>
    %c0_6 = arith.constant 0 : index
    %c0_7 = arith.constant 0 : index
    %8 = vector.load %arg4[%c0_6, %c0_7] : memref<128x8xf32, #tpu.memory_space<vmem>>, vector<128x8xf32>
    %cst_8 = arith.constant dense<0.000000e+00> : vector<8x8xf32>
    %9 = tpu.matmul %7, %8, %cst_8 {dimension_numbers = #tpu.dot_dimension_numbers<[1], [0], [0], [1], [0, 0, 1, 1], [], []>} : vector<8x128xf32>, vector<128x8xf32>, vector<8x8xf32> -> vector<8x8xf32>
    %c0_9 = arith.constant 0 : index
    %c0_10 = arith.constant 0 : index
    %10 = vector.load %arg5[%c0_9, %c0_10] : memref<1x8xf32, #tpu.memory_space<vmem>>, vector<1x8xf32>
    %11 = vector.broadcast %10 : vector<1x8xf32> to vector<8x8xf32>
    %12 = arith.addf %9, %11 : vector<8x8xf32>
    %c0_11 = arith.constant 0 : index
    %c0_12 = arith.constant 0 : index
    %13 = vector.load %arg6[%c0_11, %c0_12] : memref<8x8xf32, #tpu.memory_space<vmem>>, vector<8x8xf32>
    tpu.vector_store %arg6[%c0_11, %c0_12], %12 {strides = array<i32>} : memref<8x8xf32, #tpu.memory_space<vmem>>, vector<8x8xf32>,
    return
  }
  func.func @transform_0(%arg0: i32) -> (i32, i32) {
    %c0_i32 = arith.constant 0 : i32
    %c0_i32_0 = arith.constant 0 : i32
    return %arg0, %c0_i32 : i32, i32
  }
  func.func @transform_1(%arg0: i32) -> (i32, i32) {
    %c0_i32 = arith.constant 0 : i32
    %c0_i32_0 = arith.constant 0 : i32
    %c0_i32_1 = arith.constant 0 : i32
    return %c0_i32, %c0_i32_0 : i32, i32
  }
  func.func @transform_2(%arg0: i32) -> (i32, i32) {
    %c0_i32 = arith.constant 0 : i32
    %c0_i32_0 = arith.constant 0 : i32
    %c0_i32_1 = arith.constant 0 : i32
    return %c0_i32, %c0_i32_0 : i32, i32
  }
  func.func @transform_3(%arg0: i32) -> (i32, i32) {
    %c0_i32 = arith.constant 0 : i32
    %c0_i32_0 = arith.constant 0 : i32
    %c0_i32_1 = arith.constant 0 : i32
    return %c0_i32, %c0_i32_0 : i32, i32
  }
  func.func @transform_4(%arg0: i32) -> (i32, i32) {
    %c0_i32 = arith.constant 0 : i32
    %c0_i32_0 = arith.constant 0 : i32
    %c0_i32_1 = arith.constant 0 : i32
    return %c0_i32, %c0_i32_0 : i32, i32
  }
  func.func @transform_5(%arg0: i32) -> (i32, i32) {
    %c0_i32 = arith.constant 0 : i32
    %c0_i32_0 = arith.constant 0 : i32
    return %arg0, %c0_i32 : i32, i32
  }
}

</mosaic_0001>

<llo_original>
// kernel: tpu_custom_call.1
$region0: #{tpu_custom_call.1}
  #allocation0 [shape = 'u32[]', space=smem, size = 0x4, offset = 0x4, fixed_abs, tag = 'smem constant byte address 0x4 - core index']
  #allocation1 [shape = 'u32[144,128]{1,0:T(1,128)}', space=vmem, size = 0x12000, scoped, tag = 'internal scratch']
  %s0 = inlined_call_operand.vmem [shape: f32[8,16], index: 0, kind: input, shape index: {}]
  %s1 = inlined_call_operand.vmem [shape: f32[16,128], index: 1, kind: input, shape index: {}]
  %s2 = inlined_call_operand.vmem [shape: f32[1,128], index: 2, kind: input, shape index: {}]
  %s3 = inlined_call_operand.vmem [shape: f32[128,8], index: 3, kind: input, shape index: {}]
  %s4 = inlined_call_operand.vmem [shape: f32[1,8], index: 4, kind: input, shape index: {}]
  %s5 = inlined_call_operand.hbm [shape: f32[8,8], index: 5, kind: output, shape index: {}]
  %s6 = sld [smem:[#allocation0]]
  $region30: #{tpu_custom_call.1} parent=0
    _
  %s8 = ssub.s32 1, %s6
  %s9 = scalar_select 0, %s8, %s6
  $region1: #{tpu_custom_call.1} parent=0
    #allocation2 [shape = 'u8[4096]{0}', space=vmem, size = 0x1000, scoped, tag = 'output window, operand 0, single buffered']
    #allocation3 [shape = 's32[1]{0}', space=sflag, size = 0x4, scoped, tag = 'scoped memory for tpu_custom_call.1']
    %10 = vsyncpa [#allocation3], 0
    // Predicated region
    $region2: #{tpu_custom_call.1} parent=1 // pred_check
      _
    $region3: #{tpu_custom_call.1} parent=1 // pred_check_branch
      %12 = sbr.rel (0) target = $region5
    $region4: #{tpu_custom_call.1} parent=1 // pred_region
      _
    $region5: #{tpu_custom_call.1} parent=1 // pred_fallthru
      _
    // Predicated region
    $region6: #{tpu_custom_call.1} parent=1 // pred_check
      _
    $region7: #{tpu_custom_call.1} parent=1 // pred_check_branch
      %14 = sbr.rel (0) target = $region9
    $region8: #{tpu_custom_call.1} parent=1 // pred_region
      _
    $region9: #{tpu_custom_call.1} parent=1 // pred_fallthru
      _
    // Predicated region
    $region10: #{tpu_custom_call.1} parent=1 // pred_check
      _
    $region11: #{tpu_custom_call.1} parent=1 // pred_check_branch
      %16 = sbr.rel (0) target = $region13
    $region12: #{tpu_custom_call.1} parent=1 // pred_region
      _
    $region13: #{tpu_custom_call.1} parent=1 // pred_fallthru
      _
    // Predicated region
    $region14: #{tpu_custom_call.1} parent=1 // pred_check
      _
    $region15: #{tpu_custom_call.1} parent=1 // pred_check_branch
      %18 = sbr.rel (0) target = $region17
    $region16: #{tpu_custom_call.1} parent=1 // pred_region
      _
    $region17: #{tpu_custom_call.1} parent=1 // pred_fallthru
      _
    // Predicated region
    $region18: #{tpu_custom_call.1} parent=1 // pred_check
      _
    $region19: #{tpu_custom_call.1} parent=1 // pred_check_branch
      %20 = sbr.rel (0) target = $region21
    $region20: #{tpu_custom_call.1} parent=1 // pred_region
      _
    $region21: #{tpu_custom_call.1} parent=1 // pred_fallthru
      _
    %v21 = vld [vmem:[%s0] sm:$0xff]
    %v22 = vld [vmem:[%s1] sm:$0xff]
    %v23 = vld [vmem:[%s1 + $0x8] sm:$0xff]
    %v24 = vld [vmem:[%s2] sm:$0x1]
    %v26 = vlaneseq
    %v27 = vshrl.u32 %v26, 7
    %v28 = vsub.s32 0, %v27
    %v29 = vrot.slane %v24, %v28
    %vm31 = vcmask 130048
    %v33 = vsel %vm31, %v21, 0
    %35 = vmatprep.subr.mxu0 0.0
    %36 = vmatpush1.msra.mxu0 0.0
    %37 = vmatprep.subr.mxu0 0.0
    %38 = vmatpush1.msra.mxu0 0.0
    %39 = vmatprep.subr.mxu0 0.0
    %40 = vmatpush1.msra.mxu0 0.0
    %41 = vmatprep.subr.mxu0 0.0
    %42 = vmatpush1.msra.mxu0 0.0
    %43 = vmatprep.subr.mxu0 0.0
    %44 = vmatpush1.msra.mxu0 0.0
    %45 = vmatprep.subr.mxu0 0.0
    %46 = vmatpush1.msra.mxu0 0.0
    %47 = vmatprep.subr.mxu0 0.0
    %48 = vmatpush1.msra.mxu0 0.0
    %49 = vmatprep.subr.mxu0 0.0
    %50 = vmatpush1.msra.mxu0 0.0
    %51 = vmatprep.subr.mxu0 0.0
    %52 = vmatpush1.msra.mxu0 0.0
    %53 = vmatprep.subr.mxu0 0.0
    %54 = vmatpush1.msra.mxu0 0.0
    %55 = vmatprep.subr.mxu0 0.0
    %56 = vmatpush1.msra.mxu0 0.0
    %57 = vmatprep.subr.mxu0 0.0
    %58 = vmatpush1.msra.mxu0 0.0
    %59 = vmatprep.subr.mxu0 0.0
    %60 = vmatpush1.msra.mxu0 0.0
    %61 = vmatprep.subr.mxu0 0.0
    %62 = vmatpush1.msra.mxu0 0.0
    %63 = vmatprep.subr.mxu0 0.0
    %64 = vmatpush1.msra.mxu0 %v23
    %65 = vmatprep.subr.mxu0 0.0
    %66 = vmatpush1.msra.mxu0 %v22
    %67 = vmatprep.subr.mxu0 0.0
    %68 = vmatpush2.msra.mxu0 0.0
    %69 = vmatprep.subr.mxu0 0.0
    %70 = vmatpush2.msra.mxu0 0.0
    %71 = vmatprep.subr.mxu0 0.0
    %72 = vmatpush2.msra.mxu0 0.0
    %73 = vmatprep.subr.mxu0 0.0
    %74 = vmatpush2.msra.mxu0 0.0
    %75 = vmatprep.subr.mxu0 0.0
    %76 = vmatpush2.msra.mxu0 0.0
    %77 = vmatprep.subr.mxu0 0.0
    %78 = vmatpush2.msra.mxu0 0.0
    %79 = vmatprep.subr.mxu0 0.0
    %80 = vmatpush2.msra.mxu0 0.0
    %81 = vmatprep.subr.mxu0 0.0
    %82 = vmatpush2.msra.mxu0 0.0
    %83 = vmatprep.subr.mxu0 0.0
    %84 = vmatpush2.msra.mxu0 0.0
    %85 = vmatprep.subr.mxu0 0.0
    %86 = vmatpush2.msra.mxu0 0.0
    %87 = vmatprep.subr.mxu0 0.0
    %88 = vmatpush2.msra.mxu0 0.0
    %89 = vmatprep.subr.mxu0 0.0
    %90 = vmatpush2.msra.mxu0 0.0
    %91 = vmatprep.subr.mxu0 0.0
    %92 = vmatpush2.msra.mxu0 0.0
    %93 = vmatprep.subr.mxu0 0.0
    %94 = vmatpush2.msra.mxu0 0.0
    %95 = vmatprep.subr.mxu0 0.0
    %96 = vmatpush2.msra.mxu0 0.0
    %97 = vmatprep.subr.mxu0 0.0
    %98 = vmatpush2.msra.mxu0 0.0
    %99 = vmatprep.mubr.f32.mxu0 0.0
    %100 = vmatmul.mubr.f32.gmra.mxu0 %v33
    %v101 = vpop.f32.mrf.mxu0
    %v102 = vadd.f32 %v29, %v101
    %v103 = vpop.f32.mrf.mxu0
    %104 = vdwg.mxu0
    %v105 = vmax.f32 %v102, 0.0
    %v106 = vld [vmem:[%s3] sm:$0xff]
    %v107 = vld [vmem:[%s3 + $0x8] sm:$0xff]
    %v108 = vld [vmem:[%s3 + $0x10] sm:$0xff]
    %v109 = vld [vmem:[%s3 + $0x18] sm:$0xff]
    %v110 = vld [vmem:[%s3 + $0x20] sm:$0xff]
    %v111 = vld [vmem:[%s3 + $0x28] sm:$0xff]
    %v112 = vld [vmem:[%s3 + $0x30] sm:$0xff]
    %v113 = vld [vmem:[%s3 + $0x38] sm:$0xff]
    %v114 = vld [vmem:[%s3 + $0x40] sm:$0xff]
    %v115 = vld [vmem:[%s3 + $0x48] sm:$0xff]
    %v116 = vld [vmem:[%s3 + $0x50] sm:$0xff]
    %v117 = vld [vmem:[%s3 + $0x58] sm:$0xff]
    %v118 = vld [vmem:[%s3 + $0x60] sm:$0xff]
    %v119 = vld [vmem:[%s3 + $0x68] sm:$0xff]
    %v120 = vld [vmem:[%s3 + $0x70] sm:$0xff]
    %v121 = vld [vmem:[%s3 + $0x78] sm:$0xff]
    %v122 = vld [vmem:[%s4] sm:$0x1]
    %v124 = vlaneseq
    %v125 = vshrl.u32 %v124, 7
    %v126 = vsub.s32 0, %v125
    %v127 = vrot.slane %v122, %v126
    %129 = vmatprep.subr.mxu0 0.0
    %130 = vmatpush1.msra.mxu0 %v121
    %131 = vmatprep.subr.mxu0 0.0
    %132 = vmatpush1.msra.mxu0 %v120
    %133 = vmatprep.subr.mxu0 0.0
    %134 = vmatpush1.msra.mxu0 %v119
    %135 = vmatprep.subr.mxu0 0.0
    %136 = vmatpush1.msra.mxu0 %v118
    %137 = vmatprep.subr.mxu0 0.0
    %138 = vmatpush1.msra.mxu0 %v117
    %139 = vmatprep.subr.mxu0 0.0
    %140 = vmatpush1.msra.mxu0 %v116
    %141 = vmatprep.subr.mxu0 0.0
    %142 = vmatpush1.msra.mxu0 %v115
    %143 = vmatprep.subr.mxu0 0.0
    %144 = vmatpush1.msra.mxu0 %v114
    %145 = vmatprep.subr.mxu0 0.0
    %146 = vmatpush1.msra.mxu0 %v113
    %147 = vmatprep.subr.mxu0 0.0
    %148 = vmatpush1.msra.mxu0 %v112
    %149 = vmatprep.subr.mxu0 0.0
    %150 = vmatpush1.msra.mxu0 %v111
    %151 = vmatprep.subr.mxu0 0.0
    %152 = vmatpush1.msra.mxu0 %v110
    %153 = vmatprep.subr.mxu0 0.0
    %154 = vmatpush1.msra.mxu0 %v109
    %155 = vmatprep.subr.mxu0 0.0
    %156 = vmatpush1.msra.mxu0 %v108
    %157 = vmatprep.subr.mxu0 0.0
    %158 = vmatpush1.msra.mxu0 %v107
    %159 = vmatprep.subr.mxu0 0.0
    %160 = vmatpush1.msra.mxu0 %v106
    %161 = vmatprep.subr.mxu0 0.0
    %162 = vmatpush2.msra.mxu0 0.0
    %163 = vmatprep.subr.mxu0 0.0
    %164 = vmatpush2.msra.mxu0 0.0
    %165 = vmatprep.subr.mxu0 0.0
    %166 = vmatpush2.msra.mxu0 0.0
    %167 = vmatprep.subr.mxu0 0.0
    %168 = vmatpush2.msra.mxu0 0.0
    %169 = vmatprep.subr.mxu0 0.0
    %170 = vmatpush2.msra.mxu0 0.0
    %171 = vmatprep.subr.mxu0 0.0
    %172 = vmatpush2.msra.mxu0 0.0
    %173 = vmatprep.subr.mxu0 0.0
    %174 = vmatpush2.msra.mxu0 0.0
    %175 = vmatprep.subr.mxu0 0.0
    %176 = vmatpush2.msra.mxu0 0.0
    %177 = vmatprep.subr.mxu0 0.0
    %178 = vmatpush2.msra.mxu0 0.0
    %179 = vmatprep.subr.mxu0 0.0
    %180 = vmatpush2.msra.mxu0 0.0
    %181 = vmatprep.subr.mxu0 0.0
    %182 = vmatpush2.msra.mxu0 0.0
    %183 = vmatprep.subr.mxu0 0.0
    %184 = vmatpush2.msra.mxu0 0.0
    %185 = vmatprep.subr.mxu0 0.0
    %186 = vmatpush2.msra.mxu0 0.0
    %187 = vmatprep.subr.mxu0 0.0
    %188 = vmatpush2.msra.mxu0 0.0
    %189 = vmatprep.subr.mxu0 0.0
    %190 = vmatpush2.msra.mxu0 0.0
    %191 = vmatprep.subr.mxu0 0.0
    %192 = vmatpush2.msra.mxu0 0.0
    %193 = vmatprep.mubr.f32.mxu0 0.0
    %194 = vmatmul.mubr.f32.gmra.mxu0 %v105
    %v195 = vpop.f32.mrf.mxu0
    %v196 = vadd.f32 %v127, %v195
    %v197 = vpop.f32.mrf.mxu0
    %198 = vdwg.mxu0
    %vm199 = vcmask 64512
    %200 = vst.msk [vmem:[#allocation2] sm:$0xff] %vm199, %v196
    // Predicated region
    $region22: #{tpu_custom_call.1} parent=1 // pred_check
      _
    $region23: #{tpu_custom_call.1} parent=1 // pred_check_branch
      %202 = sbr.rel (0) target = $region25
    $region24: #{tpu_custom_call.1} parent=1 // pred_region
      %s204 = ssub.s32 128, 128
      %205 = vsyncadd [#allocation3], %s204
      %s207 = sshll.u32 [#allocation2], 4
      %s208 = int_to_ptr.vmem [resolvable:$true] %s207
      %210 = dma.vmem_to_hbm [thread:$0]  %s208, 128, %s5, [#allocation3]
    $region25: #{tpu_custom_call.1} parent=1 // pred_fallthru
      _
    // Predicated region
    $region26: #{tpu_custom_call.1} parent=1 // pred_check
      _
    $region27: #{tpu_custom_call.1} parent=1 // pred_check_branch
      %212 = sbr.rel (0) target = $region29
    $region28: #{tpu_custom_call.1} parent=1 // pred_region
      %213 = dma.done [#allocation3], 128
    $region29: #{tpu_custom_call.1} parent=1 // pred_fallthru
      _
    %214 = vsyncpa [#allocation3], 1

</llo_original>
